<compile_context>
chip_gen: v7x
topology: tpu7x:2x2x1
jax: 0.10.0
libtpu: 0.0.40
codegen_flags: <defaults>
</compile_context>

<pallas_src>
import functools

import jax
import jax.numpy as jnp
from jax.experimental import pallas as pl
from jax.experimental.pallas import tpu as pltpu


def _round_up(a, b):
    return -(-a // b) * b


def _hilbert_conv1d_kernel(x_ref, halo_ref, w_ref, b_ref, o_ref, *, K):
    # x_ref   : (1, C_pad, TL)       bf16  main window for this output tile
    # halo_ref: (1, C_pad, W_EXTRA)  bf16  next W_EXTRA lanes (only the first K-1 are used)
    # w_ref   : (2*C_out, K*C_pad)   bf16  rows [0,C_out) real taps, [C_out,2*C_out) Hilbert taps
    # b_ref   : (C_out, 1)           f32
    # o_ref   : (1, C_out, TL)       x.dtype
    x0 = x_ref[0]                                             # (C_pad, TL) bf16
    TL = x0.shape[-1]
    if K == 1:
        slab = x0
    else:
        # bf16 window + static lane-shifted views -> (K*C_pad, TL) im2col slab (row = k*C_pad+c).
        # Pieces are C_pad (=multiple of 16) rows each, so bf16 sublane packing stays aligned;
        # slab build is pure data movement (no bf16 VALU math).
        win = jnp.concatenate([x0, halo_ref[0]], axis=-1)     # (C_pad, TL + W_EXTRA) bf16
        slab = jnp.concatenate([win[:, k:k + TL] for k in range(K)], axis=0)
    # Single MXU matmul yields both real and Hilbert accumulators (f32 accumulation).
    acc = jnp.dot(w_ref[...], slab, preferred_element_type=jnp.float32)    # (2*C_out, TL) f32
    c_out = acc.shape[0] // 2
    re = acc[:c_out]
    im = acc[c_out:]
    # f32 epilogue; bias broadcasts over TL; masked partial store only on the last tile.
    o_ref[0] = (jnp.sqrt(re * re + im * im) + b_ref[...]).astype(o_ref.dtype)


def hilbert_conv1d(x, weight_r, bias, *, stride=1, padding=0, tile_l=1024):
    """x: (N, C_in, L); weight_r: (C_out, C_in, K); bias: (C_out,)."""
    N, C_in, L = x.shape
    C_out, C_in_w, K = weight_r.shape
    assert C_in_w == C_in, "groups != 1 not supported (module forward() uses groups=1)"

    # --- glue: Hilbert-shifted weights via FFT (matches torch.fft.rfft/irfft path) ---
    # TODO(synk): FFT weight prep stays as one-time JAX glue (no in-kernel FFT needed).
    w_fft = jnp.fft.rfft(weight_r.astype(jnp.float32), axis=-1) * jnp.exp(1j * jnp.pi * 0.5)
    weight_i = jnp.real(jnp.fft.irfft(w_fft, n=K, axis=-1)).astype(weight_r.dtype)

    L_out = (L + 2 * padding - K) // stride + 1
    assert L_out > 0, "invalid conv geometry"

    # --- stride>1: polyphase decimation in the wrapper so the kernel is a stride-1 conv ---
    if stride > 1:
        Kq = -(-K // stride)
        wr = jnp.pad(weight_r, ((0, 0), (0, 0), (0, Kq * stride - K)))
        wi = jnp.pad(weight_i, ((0, 0), (0, 0), (0, Kq * stride - K)))
        # w_new[o, c*stride+p, q] = w[o, c, q*stride+p]
        wr = wr.reshape(C_out, C_in, Kq, stride).transpose(0, 1, 3, 2).reshape(C_out, C_in * stride, Kq)
        wi = wi.reshape(C_out, C_in, Kq, stride).transpose(0, 1, 3, 2).reshape(C_out, C_in * stride, Kq)
        C_eff, K_eff = C_in * stride, Kq
    else:
        wr, wi = weight_r, weight_i
        C_eff, K_eff = C_in, K

    # --- tile / pad geometry ---
    W_EXTRA = max(128, _round_up(K_eff - 1, 128))               # halo, multiple of 128
    TL = min(_round_up(tile_l, W_EXTRA), _round_up(L_out, W_EXTRA))  # lane-dense tile, W_EXTRA | TL
    num_l = -(-L_out // TL)
    L_out_pad = num_l * TL
    Lq_total = L_out_pad + W_EXTRA                               # streamed input lane extent
    C_pad = _round_up(C_eff, 16)                                 # bf16 sublane-packed im2col rows

    # --- build the streamed bf16 input in as few HBM passes as possible ---
    # TODO(synk): for padding==0 and C_eff%16==0 the pad pass could be elided entirely with
    # in-kernel edge masking; kept as one consolidated pad (cast folded in) for simplicity.
    if stride > 1:
        Lp = L + 2 * padding
        Lq0 = -(-Lp // stride)
        # one pad pass (conv zero-pad + round to multiple of stride), cast folded in
        xp = jnp.pad(x.astype(jnp.bfloat16),
                     ((0, 0), (0, 0), (padding, padding + Lq0 * stride - Lp)))
        # x_dec[n, c*stride+p, m] = xp[n, c, m*stride+p]
        xd = xp.reshape(N, C_in, Lq0, stride).transpose(0, 1, 3, 2).reshape(N, C_in * stride, Lq0)
        pad_l = max(0, Lq_total - xd.shape[-1])
        xd = jnp.pad(xd, ((0, 0), (0, C_pad - C_eff), (0, pad_l)))[:, :, :Lq_total]
    else:
        # single consolidated pad: conv zero-pad + channel pad + halo/length pad, bf16 cast folded
        right = max(0, Lq_total - L - padding)
        xd = jnp.pad(x.astype(jnp.bfloat16),
                     ((0, 0), (0, C_pad - C_eff), (padding, right)))[:, :, :Lq_total]

    # --- flatten weights to (2*C_out, K_eff*C_pad): row = k*C_pad + c; stack real + Hilbert ---
    if C_pad != C_eff:
        wr = jnp.pad(wr, ((0, 0), (0, C_pad - C_eff), (0, 0)))
        wi = jnp.pad(wi, ((0, 0), (0, C_pad - C_eff), (0, 0)))
    wr_flat = jnp.transpose(wr, (0, 2, 1)).reshape(C_out, K_eff * C_pad)
    wi_flat = jnp.transpose(wi, (0, 2, 1)).reshape(C_out, K_eff * C_pad)
    w_all = jnp.concatenate([wr_flat, wi_flat], axis=0).astype(jnp.bfloat16)
    bias_col = bias.reshape(C_out, 1).astype(jnp.float32)

    kernel = functools.partial(_hilbert_conv1d_kernel, K=K_eff)
    halo_blocks_per_tile = TL // W_EXTRA
    itemsize = jnp.dtype(x.dtype).itemsize

    out = pl.pallas_call(
        kernel,
        out_shape=jax.ShapeDtypeStruct((N, C_out, L_out), x.dtype),
        grid=(N, num_l),
        in_specs=[
            # streamed main window: O(tile) VMEM, independent of L
            pl.BlockSpec((1, C_pad, TL), lambda b, j: (b, 0, j)),
            # halo: the next W_EXTRA lanes (same array passed twice; W_EXTRA | TL)
            pl.BlockSpec((1, C_pad, W_EXTRA),
                         lambda b, j: (b, 0, (j + 1) * halo_blocks_per_tile)),
            pl.BlockSpec((2 * C_out, K_eff * C_pad), lambda b, j: (0, 0)),   # resident weights
            pl.BlockSpec((C_out, 1), lambda b, j: (0, 0)),                    # resident bias
        ],
        out_specs=pl.BlockSpec((1, C_out, TL), lambda b, j: (b, 0, j)),
        compiler_params=pltpu.CompilerParams(
            dimension_semantics=("parallel", "parallel"),
            vmem_limit_bytes=32 * 1024 * 1024),
        cost_estimate=pl.CostEstimate(
            flops=2 * N * num_l * (2 * C_out) * (K_eff * C_pad) * TL,
            transcendentals=N * C_out * L_out_pad,
            bytes_accessed=(N * num_l * C_pad * (TL + W_EXTRA) * 2   # bf16 x reads (main + halo)
                            + w_all.size * 2 + C_out * 4
                            + N * C_out * L_out * itemsize)),
    )(xd, xd, w_all, bias_col)

    return out


def _reference(x, weight_r, bias, *, stride=1, padding=0):
    """Pure-JAX f32 reference mirroring the PyTorch forward."""
    K = weight_r.shape[-1]
    w_fft = jnp.fft.rfft(weight_r, axis=-1) * jnp.exp(1j * jnp.pi * 0.5)
    weight_i = jnp.real(jnp.fft.irfft(w_fft, n=K, axis=-1)).astype(weight_r.dtype)
    dn = jax.lax.conv_dimension_numbers(x.shape, weight_r.shape, ("NCH", "OIH", "NCH"))
    conv = lambda w: jax.lax.conv_general_dilated(
        x, w, window_strides=(stride,), padding=[(padding, padding)], dimension_numbers=dn)
    return jnp.sqrt(conv(weight_r) ** 2 + conv(weight_i) ** 2) + bias.reshape(1, -1, 1)


if __name__ == "__main__":
    # Small shapes consistent with the nn.Conv1d-style module: N=2, C_in=4, L=16, C_out=8, K=3.
    N, C_in, L = 2, 4, 16
    C_out, K = 8, 3
    groups = 1

    key = jax.random.PRNGKey(0)
    kx, kw, kb = jax.random.split(key, 3)

    sqrtk = (groups / (C_in * K)) ** 0.5
    x = jax.random.normal(kx, (N, C_in, L), dtype=jnp.float32)
    weight_r = (jax.random.uniform(kw, (C_out, C_in // groups, K), dtype=jnp.float32) - 0.5) * 2 * sqrtk
    bias = (jax.random.uniform(kb, (C_out,), dtype=jnp.float32) - 0.5) * 2 * sqrtk

    # Default module config: stride=1, padding=0.
    out = jax.block_until_ready(hilbert_conv1d(x, weight_r, bias, stride=1, padding=0))
    ref = _reference(x, weight_r, bias, stride=1, padding=0)
    assert out.shape == ref.shape == (N, C_out, L - K + 1)
    # bf16 matmul operands (f32 accumulation) -> slightly loosened tolerance vs f32 reference.
    assert jnp.allclose(out, ref, atol=5e-2, rtol=5e-2), "mismatch vs reference (stride=1)"

    # Non-default config exercising the polyphase-decimation path: stride=2, padding=1.
    out2 = jax.block_until_ready(hilbert_conv1d(x, weight_r, bias, stride=2, padding=1))
    ref2 = _reference(x, weight_r, bias, stride=2, padding=1)
    assert out2.shape == ref2.shape
    assert jnp.allclose(out2, ref2, atol=5e-2, rtol=5e-2), "mismatch vs reference (stride=2)"

    print("KERNEL_OK")
</pallas_src>

<mosaic_0001>
module attributes {stable_mosaic.version = 11 : i64} {
  func.func @_hilbert_conv1d_kernel(%arg0: i32, %arg1: i32, %arg2: memref<1x16x128xbf16, #tpu.memory_space<vmem>>, %arg3: memref<1x16x128xbf16, #tpu.memory_space<vmem>>, %arg4: memref<16x48xbf16, #tpu.memory_space<vmem>>, %arg5: memref<8x1xf32, #tpu.memory_space<vmem>>, %arg6: memref<1x8x128xf32, #tpu.memory_space<vmem>>) attributes {dimension_semantics = [#tpu.dimension_semantics<parallel>, #tpu.dimension_semantics<parallel>], iteration_bounds = array<i64: 2, 1>, scalar_prefetch = 0 : i64, scratch_operands = 0 : i64, tpu.core_type = #tpu.core_type<tc>, window_params = [{transform_indices = @transform_0, window_bounds = array<i64: 1, 16, 128>}, {transform_indices = @transform_1, window_bounds = array<i64: 1, 16, 128>}, {pipeline_mode = #tpu.pipeline_mode<synchronous>, transform_indices = @transform_2, window_bounds = array<i64: 16, 48>}, {pipeline_mode = #tpu.pipeline_mode<synchronous>, transform_indices = @transform_3, window_bounds = array<i64: 8, 1>}, {transform_indices = @transform_4, window_bounds = array<i64: 1, 8, 128>}]} {
    %c0 = arith.constant 0 : index
    %c0_0 = arith.constant 0 : index
    %c0_1 = arith.constant 0 : index
    %0 = vector.load %arg2[%c0, %c0_0, %c0_1] : memref<1x16x128xbf16, #tpu.memory_space<vmem>>, vector<1x16x128xbf16>
    %1 = vector.shape_cast %0 : vector<1x16x128xbf16> to vector<16x128xbf16>
    %c0_2 = arith.constant 0 : index
    %c0_3 = arith.constant 0 : index
    %c0_4 = arith.constant 0 : index
    %2 = vector.load %arg3[%c0_2, %c0_3, %c0_4] : memref<1x16x128xbf16, #tpu.memory_space<vmem>>, vector<1x16x128xbf16>
    %3 = vector.shape_cast %2 : vector<1x16x128xbf16> to vector<16x128xbf16>
    %4 = tpu.concatenate %1, %3 in 1 : vector<16x128xbf16>, vector<16x128xbf16> -> vector<16x256xbf16>
    %5 = vector.extract_strided_slice %4 {offsets = [0, 0], sizes = [16, 128], strides = [1, 1]} : vector<16x256xbf16> to vector<16x128xbf16>
    %6 = vector.extract_strided_slice %4 {offsets = [0, 1], sizes = [16, 128], strides = [1, 1]} : vector<16x256xbf16> to vector<16x128xbf16>
    %7 = vector.extract_strided_slice %4 {offsets = [0, 2], sizes = [16, 128], strides = [1, 1]} : vector<16x256xbf16> to vector<16x128xbf16>
    %8 = tpu.concatenate %5, %6, %7 in 0 : vector<16x128xbf16>, vector<16x128xbf16>, vector<16x128xbf16> -> vector<48x128xbf16>
    %c0_5 = arith.constant 0 : index
    %c0_6 = arith.constant 0 : index
    %9 = vector.load %arg4[%c0_5, %c0_6] : memref<16x48xbf16, #tpu.memory_space<vmem>>, vector<16x48xbf16>
    %cst = arith.constant dense<0.000000e+00> : vector<16x128xf32>
    %10 = tpu.matmul %9, %8, %cst {dimension_numbers = #tpu.dot_dimension_numbers<[1], [0], [0], [1], [0, 0, 1, 1], [], []>} : vector<16x48xbf16>, vector<48x128xbf16>, vector<16x128xf32> -> vector<16x128xf32>
    %11 = vector.extract_strided_slice %10 {offsets = [0, 0], sizes = [8, 128], strides = [1, 1]} : vector<16x128xf32> to vector<8x128xf32>
    %12 = vector.extract_strided_slice %10 {offsets = [8, 0], sizes = [8, 128], strides = [1, 1]} : vector<16x128xf32> to vector<8x128xf32>
    %13 = arith.mulf %11, %11 : vector<8x128xf32>
    %14 = arith.mulf %12, %12 : vector<8x128xf32>
    %15 = arith.addf %13, %14 : vector<8x128xf32>
    %16 = math.sqrt %15 : vector<8x128xf32>
    %c0_7 = arith.constant 0 : index
    %c0_8 = arith.constant 0 : index
    %17 = vector.load %arg5[%c0_7, %c0_8] : memref<8x1xf32, #tpu.memory_space<vmem>>, vector<8x1xf32>
    %18 = vector.broadcast %17 : vector<8x1xf32> to vector<8x128xf32>
    %19 = arith.addf %16, %18 : vector<8x128xf32>
    %c0_9 = arith.constant 0 : index
    %c0_10 = arith.constant 0 : index
    %c0_11 = arith.constant 0 : index
    %20 = vector.load %arg6[%c0_9, %c0_10, %c0_11] : memref<1x8x128xf32, #tpu.memory_space<vmem>>, vector<1x8x128xf32>
    %21 = vector.shape_cast %20 : vector<1x8x128xf32> to vector<8x128xf32>
    %22 = vector.shape_cast %19 : vector<8x128xf32> to vector<1x8x128xf32>
    tpu.vector_store %arg6[%c0_9, %c0_10, %c0_11], %22 {strides = array<i32>} : memref<1x8x128xf32, #tpu.memory_space<vmem>>, vector<1x8x128xf32>,
    return
  }
  func.func @transform_0(%arg0: i32, %arg1: i32) -> (i32, i32, i32) {
    %c0_i32 = arith.constant 0 : i32
    %c0_i32_0 = arith.constant 0 : i32
    return %arg0, %c0_i32, %arg1 : i32, i32, i32
  }
  func.func @transform_1(%arg0: i32, %arg1: i32) -> (i32, i32, i32) {
    %c1_i32 = arith.constant 1 : i32
    %0 = arith.addi %arg1, %c1_i32 : i32
    %c1_i32_0 = arith.constant 1 : i32
    %1 = arith.muli %0, %c1_i32_0 : i32
    %c0_i32 = arith.constant 0 : i32
    %c0_i32_1 = arith.constant 0 : i32
    return %arg0, %c0_i32, %1 : i32, i32, i32
  }
  func.func @transform_2(%arg0: i32, %arg1: i32) -> (i32, i32) {
    %c0_i32 = arith.constant 0 : i32
    %c0_i32_0 = arith.constant 0 : i32
    %c0_i32_1 = arith.constant 0 : i32
    return %c0_i32, %c0_i32_0 : i32, i32
  }
  func.func @transform_3(%arg0: i32, %arg1: i32) -> (i32, i32) {
    %c0_i32 = arith.constant 0 : i32
    %c0_i32_0 = arith.constant 0 : i32
    %c0_i32_1 = arith.constant 0 : i32
    return %c0_i32, %c0_i32_0 : i32, i32
  }
  func.func @transform_4(%arg0: i32, %arg1: i32) -> (i32, i32, i32) {
    %c0_i32 = arith.constant 0 : i32
    %c0_i32_0 = arith.constant 0 : i32
    return %arg0, %c0_i32, %arg1 : i32, i32, i32
  }
}

</mosaic_0001>

<llo_original>
// kernel: tpu_custom_call.1
$region0: #{tpu_custom_call.1}
  #allocation0 [shape = 'u32[]', space=smem, size = 0x4, offset = 0x4, fixed_abs, tag = 'smem constant byte address 0x4 - core index']
  #allocation1 [shape = 'u32[144,128]{1,0:T(1,128)}', space=vmem, size = 0x12000, scoped, tag = 'internal scratch']
  %s0 = inlined_call_operand.hbm [shape: bf16[2,16,256], index: 0, kind: input, shape index: {}]
  %s1 = inlined_call_operand.hbm [shape: bf16[2,16,256], index: 1, kind: input, shape index: {}]
  %s2 = inlined_call_operand.vmem [shape: bf16[16,48], index: 2, kind: input, shape index: {}]
  %s3 = inlined_call_operand.vmem [shape: f32[8,1], index: 3, kind: input, shape index: {}]
  %s4 = inlined_call_operand.hbm [shape: f32[2,8,14], index: 4, kind: output, shape index: {}]
  %s5 = sld [smem:[#allocation0]]
  $region57: #{tpu_custom_call.1} parent=0
    _
  %s7 = ssub.s32 1, %s5
  %s8 = scalar_select 0, %s7, %s5
  $region1: #{tpu_custom_call.1} parent=0
    #allocation2 [shape = 'u8[8192]{0}', space=vmem, size = 0x2000, scoped, tag = 'input window, operand 0']
    #allocation3 [shape = 's32[2]{0}', space=sflag, size = 0x8, scoped, tag = 'scoped memory for tpu_custom_call.1']
    #allocation4 [shape = 's32[2]{0}', space=sflag, size = 0x8, scoped, tag = 'scoped memory for tpu_custom_call.1']
    #allocation5 [shape = 'u8[8192]{0}', space=vmem, size = 0x2000, scoped, tag = 'input window, operand 1']
    #allocation6 [shape = 's32[2]{0}', space=sflag, size = 0x8, scoped, tag = 'scoped memory for tpu_custom_call.1']
    #allocation7 [shape = 'u8[8192]{0}', space=vmem, size = 0x2000, scoped, tag = 'output window, operand 0']
    %9 = vsyncpa [#allocation3], 0
    %s10 = scalar_lea.sflag [#allocation3], 1
    %11 = vsyncpa %s10, 0
    %12 = vsyncpa [#allocation6], 0
    %s13 = scalar_lea.sflag [#allocation6], 1
    %14 = vsyncpa %s13, 0
    %15 = vsyncpa [#allocation4], 0
    %s16 = scalar_lea.sflag [#allocation4], 1
    %17 = vsyncpa %s16, 0
    loop: start=0, step=1, limit=4
    $region2: #{tpu_custom_call.1} parent=1 // loop_pre_header
      _
    $region3: #{tpu_custom_call.1} parent=1 // loop_header
      %s19 = sphi 0, %s23
      %p20 = scmp.ge.s32.totalorder %s19, 4
      %s26 = sphi 0, %s38
      %s27 = sphi 0, %s34
      %s28 = sphi 0, %s26
      %s29 = sphi 0, %s27
      %s30 = sphi 0, %s28
      %s31 = sphi 0, %s29
      %s43 = sphi 0, %s45
      %s46 = sphi 0, %s43
      %s47 = sphi 0, %s46
      %s63 = sphi 0, %s47
      %s73 = sphi 0, %s75
      %s76 = sphi 0, %s73
      %s77 = sphi 0, %s76
      %s93 = sphi 0, %s77
      %s97 = sphi 0, %s97
      %s99 = sphi 0, %s97
      %s100 = sphi 0, %s99
      %s114 = sphi 0, %s100
      %s118 = sphi 0, %s118
      %s120 = sphi 0, %s118
      %s121 = sphi 0, %s120
      %s135 = sphi 0, %s121
      %s143 = sphi 0, %s145
      %s146 = sphi 0, %s143
      %s147 = sphi 0, %s146
      %s163 = sphi 0, %s147
    $region4: #{tpu_custom_call.1} parent=1 // loop_header_branch
      %22 = sbr.rel (%p20) target = $region8
    $region5: #{tpu_custom_call.1} parent=1 // loop_body
      %s24 = ssub.s32 %s19, 1
      %s25 = ssub.s32 %s19, 2
      %s32 = sadd.s32 1, %s27
      %p33 = scmp.ge.s32.totalorder %s32, 1
      %s34 = scalar_select %p33, 0, %s32
      %s35 = sadd.s32 1, %s26
      %s36 = scalar_select %p33, %s35, %s26
      %p37 = scmp.ge.s32.totalorder %s36, 2
      %s38 = scalar_select %p37, 0, %s36
      %s39 = ssub.s32 %s26, %s38
      %s40 = ssub.s32 %s27, %s34
      %s41 = sor.u32 %s39, %s40
      %p42 = scmp.eq.s32.totalorder %s41, 0
      %s44 = sadd.s32 %s43, 1
      %s45 = scalar_select %p42, %s43, %s44
      %p48 = pneg %p42
      %p49 = scmp.eq.s32.totalorder %s19, 1
      %p50 = por %p48, %p49
      %p51 = scmp.ne.s32.totalorder %s43, %s46
      %p52 = scmp.eq.s32.totalorder %s19, 0
      %p53 = por %p51, %p52
      %p54 = scmp.ne.s32.totalorder %s43, %s46
      %p55 = scmp.eq.s32.totalorder %s24, 1
      %p56 = por %p54, %p55
      %p57 = scmp.ne.s32.totalorder %s46, %s47
      %p58 = scmp.eq.s32.totalorder %s24, 0
      %p59 = por %p57, %p58
      %p60 = scmp.ne.s32.totalorder %s46, %s47
      %p61 = scmp.eq.s32.totalorder %s25, 1
      %p62 = por %p60, %p61
      %p64 = scmp.ne.s32.totalorder %s47, %s63
      %p65 = scmp.eq.s32.totalorder %s25, 0
      %p66 = por %p64, %p65
      %s67 = sadd.s32 %s27, 1
      %s68 = sadd.s32 %s34, 1
      %s69 = ssub.s32 %s26, %s38
      %s70 = ssub.s32 %s67, %s68
      %s71 = sor.u32 %s69, %s70
      %p72 = scmp.eq.s32.totalorder %s71, 0
      %s74 = sadd.s32 %s73, 1
      %s75 = scalar_select %p72, %s73, %s74
      %p78 = pneg %p72
      %p79 = scmp.eq.s32.totalorder %s19, 1
      %p80 = por %p78, %p79
      %p81 = scmp.ne.s32.totalorder %s73, %s76
      %p82 = scmp.eq.s32.totalorder %s19, 0
      %p83 = por %p81, %p82
      %p84 = scmp.ne.s32.totalorder %s73, %s76
      %p85 = scmp.eq.s32.totalorder %s24, 1
      %p86 = por %p84, %p85
      %p87 = scmp.ne.s32.totalorder %s76, %s77
      %p88 = scmp.eq.s32.totalorder %s24, 0
      %p89 = por %p87, %p88
      %p90 = scmp.ne.s32.totalorder %s76, %s77
      %p91 = scmp.eq.s32.totalorder %s25, 1
      %p92 = por %p90, %p91
      %p94 = scmp.ne.s32.totalorder %s77, %s93
      %p95 = scmp.eq.s32.totalorder %s25, 0
      %p96 = por %p94, %p95
      %s98 = sadd.s32 %s97, 1
      %p101 = scmp.eq.s32.totalorder %s19, 1
      %p102 = scmp.ne.s32.totalorder %s97, %s99
      %p103 = scmp.eq.s32.totalorder %s19, 0
      %p104 = por %p102, %p103
      %p105 = scmp.ne.s32.totalorder %s97, %s99
      %p106 = scmp.eq.s32.totalorder %s24, 1
      %p107 = por %p105, %p106
      %p108 = scmp.ne.s32.totalorder %s99, %s100
      %p109 = scmp.eq.s32.totalorder %s24, 0
      %p110 = por %p108, %p109
      %p111 = scmp.ne.s32.totalorder %s99, %s100
      %p112 = scmp.eq.s32.totalorder %s25, 1
      %p113 = por %p111, %p112
      %p115 = scmp.ne.s32.totalorder %s100, %s114
      %p116 = scmp.eq.s32.totalorder %s25, 0
      %p117 = por %p115, %p116
      %s119 = sadd.s32 %s118, 1
      %p122 = scmp.eq.s32.totalorder %s19, 1
      %p123 = scmp.ne.s32.totalorder %s118, %s120
      %p124 = scmp.eq.s32.totalorder %s19, 0
      %p125 = por %p123, %p124
      %p126 = scmp.ne.s32.totalorder %s118, %s120
      %p127 = scmp.eq.s32.totalorder %s24, 1
      %p128 = por %p126, %p127
      %p129 = scmp.ne.s32.totalorder %s120, %s121
      %p130 = scmp.eq.s32.totalorder %s24, 0
      %p131 = por %p129, %p130
      %p132 = scmp.ne.s32.totalorder %s120, %s121
      %p133 = scmp.eq.s32.totalorder %s25, 1
      %p134 = por %p132, %p133
      %p136 = scmp.ne.s32.totalorder %s121, %s135
      %p137 = scmp.eq.s32.totalorder %s25, 0
      %p138 = por %p136, %p137
      %s139 = ssub.s32 %s26, %s38
      %s140 = ssub.s32 %s27, %s34
      %s141 = sor.u32 %s139, %s140
      %p142 = scmp.eq.s32.totalorder %s141, 0
      %s144 = sadd.s32 %s143, 1
      %s145 = scalar_select %p142, %s143, %s144
      %p148 = pneg %p142
      %p149 = scmp.eq.s32.totalorder %s19, 1
      %p150 = por %p148, %p149
      %p151 = scmp.ne.s32.totalorder %s143, %s146
      %p152 = scmp.eq.s32.totalorder %s19, 0
      %p153 = por %p151, %p152
      %p154 = scmp.ne.s32.totalorder %s143, %s146
      %p155 = scmp.eq.s32.totalorder %s24, 1
      %p156 = por %p154, %p155
      %p157 = scmp.ne.s32.totalorder %s146, %s147
      %p158 = scmp.eq.s32.totalorder %s24, 0
      %p159 = por %p157, %p158
      %p160 = scmp.ne.s32.totalorder %s146, %s147
      %p161 = scmp.eq.s32.totalorder %s25, 1
      %p162 = por %p160, %p161
      %p164 = scmp.ne.s32.totalorder %s147, %s163
      %p165 = scmp.eq.s32.totalorder %s25, 0
      %p166 = por %p164, %p165
      %p167 = scmp.le.s32.totalorder 1, %s19
      %p168 = scmp.lt.s32.totalorder %s19, 3
      %p169 = pnand %p167, %p168
      %p170 = pneg %p169
      // Predicated region
      $region9: #{tpu_custom_call.1} parent=5 // pred_check
        _
      $region10: #{tpu_custom_call.1} parent=5 // pred_check_branch
        %172 = sbr.rel (%p169) target = $region12
      $region11: #{tpu_custom_call.1} parent=5 // pred_region
        %s173 = ssub.s32 %s19, 1
        // Predicated region
        $region13: #{tpu_custom_call.1} parent=11 // pred_check
          %p174 = pneg %p110
        $region14: #{tpu_custom_call.1} parent=11 // pred_check_branch
          %176 = sbr.rel (%p174) target = $region16
        $region15: #{tpu_custom_call.1} parent=11 // pred_region
          _
        $region16: #{tpu_custom_call.1} parent=11 // pred_fallthru
          _
        // Predicated region
        $region17: #{tpu_custom_call.1} parent=11 // pred_check
          %p177 = pneg %p131
        $region18: #{tpu_custom_call.1} parent=11 // pred_check_branch
          %179 = sbr.rel (%p177) target = $region20
        $region19: #{tpu_custom_call.1} parent=11 // pred_region
          _
        $region20: #{tpu_custom_call.1} parent=11 // pred_fallthru
          _
      $region12: #{tpu_custom_call.1} parent=5 // pred_fallthru
        _
      %p180 = scmp.lt.s32.totalorder %s19, 2
      // Predicated region
      $region21: #{tpu_custom_call.1} parent=5 // pred_check
        %p181 = pneg %p180
      $region22: #{tpu_custom_call.1} parent=5 // pred_check_branch
        %183 = sbr.rel (%p181) target = $region24
      $region23: #{tpu_custom_call.1} parent=5 // pred_region
        // Predicated region
        $region25: #{tpu_custom_call.1} parent=23 // pred_check
          %p184 = pneg %p53
        $region26: #{tpu_custom_call.1} parent=23 // pred_check_branch
          %186 = sbr.rel (%p184) target = $region28
        $region27: #{tpu_custom_call.1} parent=23 // pred_region
          %s187 = sand.u32 %s43, 1
          %s188 = scalar_lea.sflag [#allocation3], %s187
          %s189 = sand.u32 %s43, 1
          %s190 = smul.addr %s189, 8
          %s191 = scalar_lea.vmem [#allocation2], %s190
          %s193 = ssub.s32 128, 128
          %194 = vsyncadd %s188, %s193
          %s195 = smul.addr %s26, 4
          %s196 = sadd.s32 %s27, %s195
          %s197 = smul.addr %s196, 64
          %s198 = scalar_lea.hbm %s0, %s197
          %s199 = sshll.u32 %s191, 4
          %s200 = int_to_ptr.vmem [resolvable:$true] %s199
          %205 = dma.hbm_to_vmem [thread:$0]  %s198, 128, %s200, %s188, 128, 64, 4
        $region28: #{tpu_custom_call.1} parent=23 // pred_fallthru
          _
        // Predicated region
        $region29: #{tpu_custom_call.1} parent=23 // pred_check
          %p206 = pneg %p83
        $region30: #{tpu_custom_call.1} parent=23 // pred_check_branch
          %208 = sbr.rel (%p206) target = $region32
        $region31: #{tpu_custom_call.1} parent=23 // pred_region
          %s209 = sand.u32 %s73, 1
          %s210 = scalar_lea.sflag [#allocation6], %s209
          %s211 = sand.u32 %s73, 1
          %s212 = smul.addr %s211, 8
          %s213 = scalar_lea.vmem [#allocation5], %s212
          %s214 = sadd.s32 %s27, 1
          %s216 = ssub.s32 128, 128
          %217 = vsyncadd %s210, %s216
          %s218 = smul.addr %s26, 4
          %s219 = sadd.s32 %s214, %s218
          %s220 = smul.addr %s219, 64
          %s221 = scalar_lea.hbm %s1, %s220
          %s222 = sshll.u32 %s213, 4
          %s223 = int_to_ptr.vmem [resolvable:$true] %s222
          %228 = dma.hbm_to_vmem [thread:$0]  %s221, 128, %s223, %s210, 128, 64, 4
        $region32: #{tpu_custom_call.1} parent=23 // pred_fallthru
          _
      $region24: #{tpu_custom_call.1} parent=5 // pred_fallthru
        _
      %p229 = scmp.le.s32.totalorder 1, %s19
      %p230 = scmp.lt.s32.totalorder %s19, 3
      %p231 = pnand %p229, %p230
      %p232 = pneg %p231
      // Predicated region
      $region33: #{tpu_custom_call.1} parent=5 // pred_check
        _
      $region34: #{tpu_custom_call.1} parent=5 // pred_check_branch
        %234 = sbr.rel (%p231) target = $region36
      $region35: #{tpu_custom_call.1} parent=5 // pred_region
        %s235 = ssub.s32 %s19, 1
        %s236 = sand.u32 %s46, 1
        %s237 = scalar_lea.sflag [#allocation3], %s236
        %s238 = sand.u32 %s46, 1
        %s239 = smul.addr %s238, 8
        %s240 = scalar_lea.vmem [#allocation2], %s239
        // Predicated region
        $region37: #{tpu_custom_call.1} parent=35 // pred_check
          %p241 = pneg %p59
        $region38: #{tpu_custom_call.1} parent=35 // pred_check_branch
          %243 = sbr.rel (%p241) target = $region40
        $region39: #{tpu_custom_call.1} parent=35 // pred_region
          %244 = dma.done %s237, 128
        $region40: #{tpu_custom_call.1} parent=35 // pred_fallthru
          _
        %s245 = sand.u32 %s76, 1
        %s246 = scalar_lea.sflag [#allocation6], %s245
        %s247 = sand.u32 %s76, 1
        %s248 = smul.addr %s247, 8
        %s249 = scalar_lea.vmem [#allocation5], %s248
        // Predicated region
        $region41: #{tpu_custom_call.1} parent=35 // pred_check
          %p250 = pneg %p89
        $region42: #{tpu_custom_call.1} parent=35 // pred_check_branch
          %252 = sbr.rel (%p250) target = $region44
        $region43: #{tpu_custom_call.1} parent=35 // pred_region
          %253 = dma.done %s246, 128
        $region44: #{tpu_custom_call.1} parent=35 // pred_fallthru
          _
        %s254 = sand.u32 %s46, 1
        %s255 = scalar_lea.sflag [#allocation3], %s254
        %s256 = sand.u32 %s46, 1
        %s257 = smul.addr %s256, 8
        %s258 = scalar_lea.vmem [#allocation2], %s257
        %p259 = pneg %p59
        %p260 = pneg %p56
        %s261 = sand.u32 %s76, 1
        %s262 = scalar_lea.sflag [#allocation6], %s261
        %s263 = sand.u32 %s76, 1
        %s264 = smul.addr %s263, 8
        %s265 = scalar_lea.vmem [#allocation5], %s264
        %p266 = pneg %p89
        %p267 = pneg %p86
        %p268 = pneg %p110
        %p269 = pneg %p107
        %p270 = pneg %p131
        %p271 = pneg %p128
        %p272 = pneg %p159
        %p273 = pneg %p156
        %s274 = sand.u32 %s146, 1
        %s275 = scalar_lea.sflag [#allocation4], %s274
        %s276 = sand.u32 %s146, 1
        %s277 = smul.addr %s276, 8
        %s278 = scalar_lea.vmem [#allocation7], %s277
        %s279 = sadd.s32 %s29, 1
        %v281 = vld [vmem:[%s240] sm:$0xf]
        %v282 = vld [vmem:[%s240 + $0x4] sm:$0xf]
        %v283 = vld [vmem:[%s249] sm:$0xf]
        %v284 = vld [vmem:[%s249 + $0x4] sm:$0xf]
        %v287 = vunpack.c.l.b16 %v281
        %v288 = vunpack.c.l.b16 %v282
        %v289 = vpack.c.b16 %v288, %v287
        %v293 = vunpack.c.l.b16 %v283
        %v294 = vunpack.c.l.b16 %v284
        %v295 = vpack.c.b16 %v294, %v293
        %296 = vrot.lane.b32.xlu0 %v289, 127
        %v297 = vpop.permute.xlu0 %296
        %298 = vrot.lane.b32.xlu0 %v295, 127
        %v299 = vpop.permute.xlu0 %298
        %vm300 = vcmask 1039360
        %v301 = vsel %vm300, %v297, %v299
        %303 = vrot.lane.b32.xlu0 %v289, 126
        %v304 = vpop.permute.xlu0 %303
        %305 = vrot.lane.b32.xlu0 %v295, 126
        %v306 = vpop.permute.xlu0 %305
        %vm307 = vcmask 1031168
        %v308 = vsel %vm307, %v304, %v306
        %v310 = vld [vmem:[%s2] sm:$0xf]
        %v311 = vld [vmem:[%s2 + $0x4] sm:$0xf]
        %v314 = vunpack.c.l.b16 %v310
        %v315 = vunpack.c.l.b16 %v311
        %v316 = vpack.c.b16 %v315, %v314
        %vm317 = vcmask 392192
        %v319 = vsel %vm317, %v316, 0
        %321 = vmatprep.subr.bf16.mxu0 0
        %322 = vmatpush1.bf16.msra.mxu0 %v289
        %323 = vmatprep.subr.bf16.mxu0 0
        %324 = vmatpush1.bf16.msra.mxu0 %v301
        %325 = vmatprep.subr.bf16.mxu0 0
        %326 = vmatpush1.bf16.msra.mxu0 %v308
        %327 = vmatprep.subr.bf16.mxu0 0
        %328 = vmatpush1.bf16.msra.mxu0 0
        %329 = vmatprep.subr.bf16.mxu0 0
        %330 = vmatpush1.bf16.msra.mxu0 0
        %331 = vmatprep.subr.bf16.mxu0 0
        %332 = vmatpush1.bf16.msra.mxu0 0
        %333 = vmatprep.subr.bf16.mxu0 0
        %334 = vmatpush1.bf16.msra.mxu0 0
        %335 = vmatprep.subr.bf16.mxu0 0
        %336 = vmatpush1.bf16.msra.mxu0 0
        %337 = vmatprep.subr.bf16.mxu0 0
        %338 = vmatpush1.bf16.msra.mxu0 0
        %339 = vmatprep.subr.bf16.mxu0 0
        %340 = vmatpush1.bf16.msra.mxu0 0
        %341 = vmatprep.subr.bf16.mxu0 0
        %342 = vmatpush1.bf16.msra.mxu0 0
        %343 = vmatprep.subr.bf16.mxu0 0
        %344 = vmatpush1.bf16.msra.mxu0 0
        %345 = vmatprep.subr.bf16.mxu0 0
        %346 = vmatpush1.bf16.msra.mxu0 0
        %347 = vmatprep.subr.bf16.mxu0 0
        %348 = vmatpush1.bf16.msra.mxu0 0
        %349 = vmatprep.subr.bf16.mxu0 0
        %350 = vmatpush1.bf16.msra.mxu0 0
        %351 = vmatprep.subr.bf16.mxu0 0
        %352 = vmatpush1.bf16.msra.mxu0 0
        %353 = vmatprep.mubr.bf16.mxu0 0
        %354 = vmatmul.mubr.bf16.gmra.mrb[0].mxu0 %v319
        %v355 = vpop.f32.mrb[0].mxu0
        %v356 = vadd.f32 0.0, %v355
        %v357 = vpop.f32.mrb[0].mxu0
        %v358 = vpop.f32.mrb[0].mxu0
        %v359 = vadd.f32 0.0, %v358
        %v360 = vpop.f32.mrb[0].mxu0
        %361 = vdwg.mxu0
        %v362 = vmul.f32 %v356, %v356
        %v363 = vmul.f32 %v359, %v359
        %v364 = vadd.f32 %v362, %v363
        %v365 = vrsqrt.pop %v364
        %v366 = vmul.f32 %v364, %v365
        %vm367 = vcmp.eq.f32.partialorder %v364, inf
        %v368 = vsel %vm367, %v364, %v366
        %vm369 = vcmp.eq.f32.partialorder %v364, 0.0
        %v370 = vand.u32 %v364, 2147483648
        %v371 = vsel %vm369, %v370, %v368
        %v372 = vld [vmem:[%s3] sm:$0xff]
        %374 = vset.pattern.permute.xlu0 0
        %375 = vperm.xlu0 %374, %v372
        %v376 = vpop.permute.xlu0 %375
        %v378 = vadd.f32 %v371, %v376
        %379 = vst [vmem:[%s278] sm:$0xff] %v378
        %s380 = sand.u32 %s146, 1
        %s381 = scalar_lea.sflag [#allocation4], %s380
        %s382 = sand.u32 %s146, 1
        %s383 = smul.addr %s382, 8
        %s384 = scalar_lea.vmem [#allocation7], %s383
        // Predicated region
        $region45: #{tpu_custom_call.1} parent=35 // pred_check
          %p385 = pneg %p156
        $region46: #{tpu_custom_call.1} parent=35 // pred_check_branch
          %387 = sbr.rel (%p385) target = $region48
        $region47: #{tpu_custom_call.1} parent=35 // pred_region
          %s389 = ssub.s32 128, 128
          %390 = vsyncadd %s381, %s389
          %s391 = sadd.s32 %s29, %s28
          %s392 = smul.addr %s391, 128
          %s393 = scalar_lea.hbm %s4, %s392
          %s395 = sshll.u32 %s384, 4
          %s396 = int_to_ptr.vmem [resolvable:$true] %s395
          %398 = dma.vmem_to_hbm [thread:$0]  %s396, 128, %s393, %s381
        $region48: #{tpu_custom_call.1} parent=35 // pred_fallthru
          _
      $region36: #{tpu_custom_call.1} parent=5 // pred_fallthru
        _
      %p399 = scmp.le.s32.totalorder 2, %s19
      // Predicated region
      $region49: #{tpu_custom_call.1} parent=5 // pred_check
        %p400 = pneg %p399
      $region50: #{tpu_custom_call.1} parent=5 // pred_check_branch
        %402 = sbr.rel (%p400) target = $region52
      $region51: #{tpu_custom_call.1} parent=5 // pred_region
        %s403 = ssub.s32 %s19, 2
        // Predicated region
        $region53: #{tpu_custom_call.1} parent=51 // pred_check
          %p404 = pneg %p162
        $region54: #{tpu_custom_call.1} parent=51 // pred_check_branch
          %406 = sbr.rel (%p404) target = $region56
        $region55: #{tpu_custom_call.1} parent=51 // pred_region
          %s407 = sand.u32 %s147, 1
          %s408 = scalar_lea.sflag [#allocation4], %s407
          %s409 = sand.u32 %s147, 1
          %s410 = smul.addr %s409, 8
          %s411 = scalar_lea.vmem [#allocation7], %s410
          %412 = dma.done %s408, 128
        $region56: #{tpu_custom_call.1} parent=51 // pred_fallthru
          _
      $region52: #{tpu_custom_call.1} parent=5 // pred_fallthru
        _
    $region6: #{tpu_custom_call.1} parent=1 // loop_footer
      %s23 = sadd.s32 1, %s19
    $region7: #{tpu_custom_call.1} parent=1 // loop_footer_branch
      %18 = sbr.rel target = $region3
    $region8: #{tpu_custom_call.1} parent=1 // loop_exit
      _
    %413 = vsyncpa [#allocation3], 1
    %s414 = scalar_lea.sflag [#allocation3], 1
    %415 = vsyncpa %s414, 1
    %416 = vsyncpa [#allocation6], 1
    %s417 = scalar_lea.sflag [#allocation6], 1
    %418 = vsyncpa %s417, 1
    %419 = vsyncpa [#allocation4], 1
    %s420 = scalar_lea.sflag [#allocation4], 1
    %421 = vsyncpa %s420, 1

</llo_original>
